<compile_context>
chip_gen: v5e
topology: v5e:2x2
jax: 0.10.0
libtpu: 0.0.40
codegen_flags: <defaults>
</compile_context>

<pallas_src>
import jax
import jax.numpy as jnp
from jax.experimental import pallas as pl
from jax.experimental.pallas import tpu as pltpu

LANES = 128
SUBLANE_ALIGN = 32  # multiple of every packed-dtype sublane tile (8/16/32)


def _vmem_capacity_bytes() -> int:
    """Per-core VMEM capacity; conservative (v7x) fallback if query fails."""
    try:
        info = pltpu.get_tpu_info()
        cap = getattr(info, "vmem_capacity_bytes", None)
        if cap:
            return int(cap)
    except Exception:
        pass
    return 64 * 1024 * 1024


def _block_budget():
    """(target_block_bytes, vmem_limit_bytes) tuned per TPU generation."""
    cap = _vmem_capacity_bytes()
    if cap >= 96 * 1024 * 1024:
        # v5e / v6e: 128 MiB physical VMEM — plenty of headroom.
        return 12 * 1024 * 1024, 64 * 1024 * 1024
    # v7x: 64 MiB per TensorCore — keep 4x block + headroom under ~48 MiB.
    return 10 * 1024 * 1024, 48 * 1024 * 1024


def _minimum_kernel(c_ref, x_ref, o_ref):
    # c_ref: SMEM scalar (shape (1,)); x_ref / o_ref: VMEM tiles.
    c = c_ref[0]
    o_ref[...] = jnp.minimum(x_ref[...], c).astype(o_ref.dtype)


def minimum_pallas(x: jax.Array, constant: jax.Array) -> jax.Array:
    """Elementwise minimum(x, constant); constant has shape (1,)."""
    orig_shape = x.shape
    out_dtype = jnp.result_type(x.dtype, constant.dtype)
    n = x.size

    if n == 0:
        return jnp.zeros(orig_shape, out_dtype)

    x_flat = jnp.reshape(x, (-1,))  # free row-major reshape (no copy)
    aligned = (n // LANES) * LANES
    rem = n - aligned

    if aligned == 0:
        # Degenerate (<128 elements): no lane-dense slab to build; one fused
        # XLA op is strictly cheaper than any kernel launch.
        return jnp.minimum(x, constant[0]).astype(out_dtype)

    rows = aligned // LANES
    x_head = x_flat if rem == 0 else x_flat[:aligned]
    x2d = jnp.reshape(x_head, (rows, LANES))  # free

    target_block_bytes, vmem_limit = _block_budget()
    itemsize = max(jnp.dtype(x.dtype).itemsize, jnp.dtype(out_dtype).itemsize)

    if rows <= SUBLANE_ALIGN:
        tile_r = rows  # block equals the full array dim (allowed)
    else:
        budget_rows = target_block_bytes // (LANES * itemsize)
        # Cap at half the rows so there are >= 2 parallel grid steps — lets
        # Mosaic shard the streaming loop across both v7x TensorCores.
        half_rows = pl.cdiv(rows, 2)
        tile_r = min(budget_rows, half_rows)
        tile_r = max(SUBLANE_ALIGN, (tile_r // SUBLANE_ALIGN) * SUBLANE_ALIGN)

    grid = (pl.cdiv(rows, tile_r),)

    in_item = jnp.dtype(x.dtype).itemsize
    out_item = jnp.dtype(out_dtype).itemsize
    cost = pl.CostEstimate(
        flops=rows * LANES,
        transcendentals=0,
        bytes_accessed=rows * LANES * (in_item + out_item),
    )

    out2d = pl.pallas_call(
        _minimum_kernel,
        out_shape=jax.ShapeDtypeStruct((rows, LANES), out_dtype),
        grid_spec=pltpu.PrefetchScalarGridSpec(
            num_scalar_prefetch=0,
            grid=grid,
            in_specs=[
                pl.BlockSpec(memory_space=pltpu.SMEM),            # scalar param
                pl.BlockSpec((tile_r, LANES), lambda i: (i, 0)),  # x tile
            ],
            out_specs=pl.BlockSpec((tile_r, LANES), lambda i: (i, 0)),
        ),
        compiler_params=pltpu.CompilerParams(
            dimension_semantics=("parallel",),
            vmem_limit_bytes=vmem_limit,
        ),
        cost_estimate=cost,
    )(constant, x2d)

    if rem == 0:
        return jnp.reshape(out2d, orig_shape)  # free

    # Ragged fallback: kernel handled the lane-aligned prefix; the <128-elem
    # tail is a tiny fused op, stitched with a single concatenate (no full
    # pad / slice passes over the tensor).
    tail = jnp.minimum(x_flat[aligned:], constant[0]).astype(out_dtype)
    out_flat = jnp.concatenate([jnp.reshape(out2d, (-1,)), tail])
    return jnp.reshape(out_flat, orig_shape)


if __name__ == "__main__":
    key = jax.random.PRNGKey(0)
    # Small NCHW input consistent with the module.
    x = jax.random.normal(key, (2, 4, 16, 16), dtype=jnp.float32)

    # Matches torch.nn.Parameter(torch.zeros((1,)))
    constant = jnp.zeros((1,), dtype=jnp.float32)

    out = minimum_pallas(x, constant)
    jax.block_until_ready(out)

    ref = jnp.minimum(x, constant)
    assert out.shape == ref.shape and out.dtype == ref.dtype
    assert jnp.allclose(out, ref), "mismatch vs reference"

    print("KERNEL_OK")
</pallas_src>

<mosaic_0001>
module attributes {stable_mosaic.version = 11 : i64} {
  func.func @_minimum_kernel(%arg0: i32, %arg1: memref<1xf32, #tpu.memory_space<smem>>, %arg2: memref<16x128xf32, #tpu.memory_space<vmem>>, %arg3: memref<16x128xf32, #tpu.memory_space<vmem>>) attributes {dimension_semantics = [#tpu.dimension_semantics<parallel>], iteration_bounds = array<i64: 1>, scalar_prefetch = 0 : i64, scratch_operands = 0 : i64, tpu.core_type = #tpu.core_type<tc>, window_params = [{transform_indices = @transform_0, window_bounds = array<i64: 1>}, {transform_indices = @transform_1, window_bounds = array<i64: 16, 128>}, {transform_indices = @transform_2, window_bounds = array<i64: 16, 128>}]} {
    %c0 = arith.constant 0 : index
    %0 = memref.load %arg1[%c0] : memref<1xf32, #tpu.memory_space<smem>>
    %c0_0 = arith.constant 0 : index
    %c0_1 = arith.constant 0 : index
    %1 = vector.load %arg2[%c0_0, %c0_1] : memref<16x128xf32, #tpu.memory_space<vmem>>, vector<16x128xf32>
    %2 = vector.broadcast %0 : f32 to vector<16x128xf32>
    %3 = arith.minimumf %1, %2 : vector<16x128xf32>
    %c0_2 = arith.constant 0 : index
    %c0_3 = arith.constant 0 : index
    %4 = vector.load %arg3[%c0_2, %c0_3] : memref<16x128xf32, #tpu.memory_space<vmem>>, vector<16x128xf32>
    tpu.vector_store %arg3[%c0_2, %c0_3], %3 {strides = array<i32>} : memref<16x128xf32, #tpu.memory_space<vmem>>, vector<16x128xf32>,
    return
  }
  func.func @transform_0(%arg0: i32) -> i32 {
    %c0_i32 = arith.constant 0 : i32
    %c0_i32_0 = arith.constant 0 : i32
    return %c0_i32 : i32
  }
  func.func @transform_1(%arg0: i32) -> (i32, i32) {
    %c0_i32 = arith.constant 0 : i32
    %c0_i32_0 = arith.constant 0 : i32
    return %arg0, %c0_i32 : i32, i32
  }
  func.func @transform_2(%arg0: i32) -> (i32, i32) {
    %c0_i32 = arith.constant 0 : i32
    %c0_i32_0 = arith.constant 0 : i32
    return %arg0, %c0_i32 : i32, i32
  }
}

</mosaic_0001>

<llo_original>
// kernel: tpu_custom_call.1
$region0: #{tpu_custom_call.1}
  #allocation0 [shape = 'u32[]', space=smem, size = 0x4, offset = 0x4, fixed_abs, tag = 'smem constant byte address 0x4 - core index']
  #allocation1 [shape = 'u32[72,128]{1,0:T(1,128)}', space=vmem, size = 0x9000, scoped, tag = 'internal scratch']
  #allocation2 [shape = 'f32[1]{0:T(128)S(6)}', space=smem, size = 0x200, scoped, tag = 'scoped memory for tpu_custom_call.1']
  %s0 = inlined_call_operand.<no memory space> [shape: f32[1], index: 0, kind: input, shape index: {}]
  %s1 = inlined_call_operand.hbm [shape: f32[16,128], index: 1, kind: input, shape index: {}]
  %s2 = inlined_call_operand.hbm [shape: f32[16,128], index: 2, kind: output, shape index: {}]
  %s3 = sld [smem:[#allocation0]]
  $region22: #{tpu_custom_call.1} parent=0
    _
  %s5 = ssub.s32 1, %s3
  %s6 = scalar_select 0, %s5, %s3
  %7 = sst [smem:[#allocation2]] %s0
  $region1: #{tpu_custom_call.1} parent=0
    #allocation3 [shape = 'u8[8192]{0}', space=vmem, size = 0x2000, scoped, tag = 'input window, operand 1, single buffered']
    #allocation4 [shape = 's32[1]{0}', space=sflag, size = 0x4, scoped, tag = 'scoped memory for tpu_custom_call.1']
    #allocation5 [shape = 's32[1]{0}', space=sflag, size = 0x4, scoped, tag = 'scoped memory for tpu_custom_call.1']
    #allocation6 [shape = 'u8[8192]{0}', space=vmem, size = 0x2000, scoped, tag = 'output window, operand 0, single buffered']
    %8 = vsyncpa [#allocation4], 0
    %9 = vsyncpa [#allocation5], 0
    // Predicated region
    $region2: #{tpu_custom_call.1} parent=1 // pred_check
      _
    $region3: #{tpu_custom_call.1} parent=1 // pred_check_branch
      %11 = sbr.rel (0) target = $region5
    $region4: #{tpu_custom_call.1} parent=1 // pred_region
      _
    $region5: #{tpu_custom_call.1} parent=1 // pred_fallthru
      _
    // Predicated region
    $region6: #{tpu_custom_call.1} parent=1 // pred_check
      _
    $region7: #{tpu_custom_call.1} parent=1 // pred_check_branch
      %13 = sbr.rel (0) target = $region9
    $region8: #{tpu_custom_call.1} parent=1 // pred_region
      %15 = vsyncadd [#allocation4], 0
      %s16 = sshll.u32 %s1, 4
      %s17 = int_to_ptr.hbm [resolvable:$true] %s16
      %s18 = sshll.u32 [#allocation3], 4
      %s19 = int_to_ptr.vmem [resolvable:$true] %s18
      %24 = dma.hbm_to_vmem [thread:$0]  %s17, 256, %s19, [#allocation4], 128, 128, 8
    $region9: #{tpu_custom_call.1} parent=1 // pred_fallthru
      _
    // Predicated region
    $region10: #{tpu_custom_call.1} parent=1 // pred_check
      _
    $region11: #{tpu_custom_call.1} parent=1 // pred_check_branch
      %26 = sbr.rel (0) target = $region13
    $region12: #{tpu_custom_call.1} parent=1 // pred_region
      %28 = dma.done [#allocation4], 256
    $region13: #{tpu_custom_call.1} parent=1 // pred_fallthru
      _
    %s29 = sld [smem:[#allocation2]]
    %v30 = vld [vmem:[#allocation3] sm:$0xff]
    %v31 = vld [vmem:[#allocation3 + $0x8] sm:$0xff]
    %v32 = vstv %s29
    %v33 = vmin.f32 %v30, %v32
    %v34 = vmin.f32 %v31, %v32
    %35 = vst [vmem:[#allocation6] sm:$0xff] %v33
    %36 = vst [vmem:[#allocation6 + $0x8] sm:$0xff] %v34
    // Predicated region
    $region14: #{tpu_custom_call.1} parent=1 // pred_check
      _
    $region15: #{tpu_custom_call.1} parent=1 // pred_check_branch
      %38 = sbr.rel (0) target = $region17
    $region16: #{tpu_custom_call.1} parent=1 // pred_region
      %40 = vsyncadd [#allocation5], 0
      %s41 = sshll.u32 [#allocation6], 4
      %s42 = int_to_ptr.vmem [resolvable:$true] %s41
      %s43 = sshll.u32 %s2, 4
      %s44 = int_to_ptr.hbm [resolvable:$true] %s43
      %49 = dma.vmem_to_hbm [thread:$0]  %s42, 256, %s44, [#allocation5], 128, 128, 8
    $region17: #{tpu_custom_call.1} parent=1 // pred_fallthru
      _
    // Predicated region
    $region18: #{tpu_custom_call.1} parent=1 // pred_check
      _
    $region19: #{tpu_custom_call.1} parent=1 // pred_check_branch
      %51 = sbr.rel (0) target = $region21
    $region20: #{tpu_custom_call.1} parent=1 // pred_region
      %53 = dma.done [#allocation5], 256
    $region21: #{tpu_custom_call.1} parent=1 // pred_fallthru
      _
    %54 = vsyncpa [#allocation4], 1
    %55 = vsyncpa [#allocation5], 1

</llo_original>
